<compile_context>
chip_gen: v6e
topology: v6e:2x2x1
jax: 0.10.0
libtpu: 0.0.40
codegen_flags: <defaults>
</compile_context>

<pallas_src>
import jax
import jax.numpy as jnp
from jax.experimental import pallas as pl
from jax.experimental.pallas import tpu as pltpu


# ----------------------------- Pallas kernel --------------------------------

def _ffn_kernel(x_ref, w1t_ref, b1_ref, w2t_ref, b2_ref, o_ref):
    # x: (C, ts) ; w1t: (Ch, C) ; b1: (Ch, 1) ; w2t: (C, Ch) ; b2: (C, 1) ; o: (C, ts)
    x = x_ref[...]
    h = jnp.dot(w1t_ref[...], x, preferred_element_type=jnp.float32)   # (Ch, ts)
    h = h + b1_ref[...]
    # LeakyReLU(0.2) on the VPU, in f32.
    h = jnp.where(h >= 0, h, jnp.float32(0.2) * h)
    y = jnp.dot(w2t_ref[...], h, preferred_element_type=jnp.float32)   # (C, ts)
    y = y + b2_ref[...]
    o_ref[...] = y.astype(o_ref.dtype)


def _choose_tile(S, ts):
    # Whole spatial extent fits in one tile -> block last dim equals the full array dim
    # (always layout-legal). Otherwise use the (128-multiple) requested tile and let the
    # ragged tail block be masked by Pallas.
    if S <= ts:
        return S
    return (ts // 128) * 128


def feed_forward(x, params, *, ts=1024):
    """x: (B, C, H, W) NCHW, same as the PyTorch module. Returns (B, C, H, W)."""
    B, C, H, W = x.shape
    Ch = params['w1'].shape[1]                      # hidden = dim * mlp_ratio
    S = H * W

    # Pure reshape (no transpose, no HBM shuffle): spatial positions land on the lane axis.
    x_rows = x.reshape(B, C, S)

    ts_eff = _choose_tile(S, ts)
    grid = (B, pl.cdiv(S, ts_eff))

    # Tiny weight transposes (<=16 KiB) done once in the wrapper.
    w1t = params['w1'].T                            # (Ch, C)
    w2t = params['w2'].T                            # (C, Ch)
    b1 = params['b1'].reshape(Ch, 1)
    b2 = params['b2'].reshape(C, 1)

    y_rows = pl.pallas_call(
        _ffn_kernel,
        out_shape=jax.ShapeDtypeStruct((B, C, S), x.dtype),
        grid_spec=pltpu.PrefetchScalarGridSpec(
            num_scalar_prefetch=0,
            grid=grid,
            in_specs=[
                pl.BlockSpec((None, C, ts_eff), lambda b, s: (b, 0, s)),  # x tile (pipelined)
                pl.BlockSpec((Ch, C), lambda b, s: (0, 0)),               # W1ᵀ: VMEM-resident
                pl.BlockSpec((Ch, 1), lambda b, s: (0, 0)),               # b1
                pl.BlockSpec((C, Ch), lambda b, s: (0, 0)),               # W2ᵀ: VMEM-resident
                pl.BlockSpec((C, 1), lambda b, s: (0, 0)),                # b2
            ],
            out_specs=pl.BlockSpec((None, C, ts_eff), lambda b, s: (b, 0, s)),
        ),
        compiler_params=pltpu.CompilerParams(
            dimension_semantics=("parallel", "parallel"),   # v7x: shard (batch, spatial) over 2 TCs
            vmem_limit_bytes=32 * 1024 * 1024,              # tiny footprint; valid on v5e/v6e/v7x
        ),
    )(x_rows, w1t, b1, w2t, b2)

    # TODO(synk): nn.Dropout is identity at inference (and p=0.0 default); no RNG path.
    return y_rows.reshape(B, C, H, W)


# ----------------------------- Reference & init ------------------------------

def feed_forward_ref(x, params):
    """Pure-jnp reference matching the PyTorch module (eval mode)."""
    h = jnp.einsum('bchw,co->bohw', x, params['w1']) + params['b1'][None, :, None, None]
    h = jnp.where(h >= 0, h, 0.2 * h)
    y = jnp.einsum('bchw,co->bohw', h, params['w2']) + params['b2'][None, :, None, None]
    return y


def init_params(key, dim, mlp_ratio=4):
    hidden = dim * mlp_ratio
    k1, k2, k3, k4 = jax.random.split(key, 4)
    s = 0.05
    f32 = jnp.float32
    return {
        # Conv2d(k=1) weights stored in matmul layout (Cin, Cout).
        'w1': jax.random.normal(k1, (dim, hidden), f32) * s,
        'b1': jax.random.normal(k2, (hidden,), f32) * s,
        'w2': jax.random.normal(k3, (hidden, dim), f32) * s,
        'b2': jax.random.normal(k4, (dim,), f32) * s,
    }


# --------------------------------- Main --------------------------------------

if __name__ == "__main__":
    dim, mlp_ratio = 32, 4

    key = jax.random.PRNGKey(0)
    kp, kx1, kx2, kx3 = jax.random.split(key, 4)
    params = init_params(kp, dim, mlp_ratio)

    # Primary input: (B, C, H, W) NCHW, small shapes. S = 256 (single spatial tile, 2 batch steps).
    x = jax.random.normal(kx1, (2, dim, 16, 16), jnp.float32)
    y = jax.block_until_ready(feed_forward(x, params))
    assert y.shape == x.shape, y.shape
    assert bool(jnp.all(jnp.isfinite(y)))
    ref = feed_forward_ref(x, params)
    assert bool(jnp.allclose(y, ref, atol=1e-4, rtol=1e-4))

    # Second check: spatial size not a multiple of 128 (S=576, block = full spatial extent).
    x2 = jax.random.normal(kx2, (2, dim, 24, 24), jnp.float32)
    y2 = jax.block_until_ready(feed_forward(x2, params))
    ref2 = feed_forward_ref(x2, params)
    assert y2.shape == x2.shape
    assert bool(jnp.allclose(y2, ref2, atol=1e-4, rtol=1e-4))

    # Third check: S > tile (S=1600 -> 2 spatial tiles, ragged tail block masked by Pallas).
    x3 = jax.random.normal(kx3, (1, dim, 40, 40), jnp.float32)
    y3 = jax.block_until_ready(feed_forward(x3, params))
    ref3 = feed_forward_ref(x3, params)
    assert y3.shape == x3.shape
    assert bool(jnp.allclose(y3, ref3, atol=1e-4, rtol=1e-4))

    print("KERNEL_OK")
</pallas_src>

<mosaic_0001>
module attributes {stable_mosaic.version = 11 : i64} {
  func.func @_ffn_kernel(%arg0: i32, %arg1: i32, %arg2: memref<1x32x256xf32, #tpu.memory_space<vmem>>, %arg3: memref<128x32xf32, #tpu.memory_space<vmem>>, %arg4: memref<128x1xf32, #tpu.memory_space<vmem>>, %arg5: memref<32x128xf32, #tpu.memory_space<vmem>>, %arg6: memref<32x1xf32, #tpu.memory_space<vmem>>, %arg7: memref<1x32x256xf32, #tpu.memory_space<vmem>>) attributes {dimension_semantics = [#tpu.dimension_semantics<parallel>, #tpu.dimension_semantics<parallel>], iteration_bounds = array<i64: 2, 1>, scalar_prefetch = 0 : i64, scratch_operands = 0 : i64, tpu.core_type = #tpu.core_type<tc>, window_params = [{transform_indices = @transform_0, window_bounds = array<i64: 1, 32, 256>}, {pipeline_mode = #tpu.pipeline_mode<synchronous>, transform_indices = @transform_1, window_bounds = array<i64: 128, 32>}, {pipeline_mode = #tpu.pipeline_mode<synchronous>, transform_indices = @transform_2, window_bounds = array<i64: 128, 1>}, {pipeline_mode = #tpu.pipeline_mode<synchronous>, transform_indices = @transform_3, window_bounds = array<i64: 32, 128>}, {pipeline_mode = #tpu.pipeline_mode<synchronous>, transform_indices = @transform_4, window_bounds = array<i64: 32, 1>}, {transform_indices = @transform_5, window_bounds = array<i64: 1, 32, 256>}]} {
    %c0 = arith.constant 0 : index
    %c0_0 = arith.constant 0 : index
    %c0_1 = arith.constant 0 : index
    %0 = vector.load %arg2[%c0, %c0_0, %c0_1] : memref<1x32x256xf32, #tpu.memory_space<vmem>>, vector<1x32x256xf32>
    %1 = vector.shape_cast %0 : vector<1x32x256xf32> to vector<32x256xf32>
    %c0_2 = arith.constant 0 : index
    %c0_3 = arith.constant 0 : index
    %2 = vector.load %arg3[%c0_2, %c0_3] : memref<128x32xf32, #tpu.memory_space<vmem>>, vector<128x32xf32>
    %cst = arith.constant dense<0.000000e+00> : vector<128x256xf32>
    %3 = tpu.matmul %2, %1, %cst {dimension_numbers = #tpu.dot_dimension_numbers<[1], [0], [0], [1], [0, 0, 1, 1], [], []>} : vector<128x32xf32>, vector<32x256xf32>, vector<128x256xf32> -> vector<128x256xf32>
    %c0_4 = arith.constant 0 : index
    %c0_5 = arith.constant 0 : index
    %4 = vector.load %arg4[%c0_4, %c0_5] : memref<128x1xf32, #tpu.memory_space<vmem>>, vector<128x1xf32>
    %5 = vector.broadcast %4 : vector<128x1xf32> to vector<128x256xf32>
    %6 = arith.addf %3, %5 : vector<128x256xf32>
    %cst_6 = arith.constant 0.000000e+00 : f32
    %7 = vector.broadcast %cst_6 : f32 to vector<128x256xf32>
    %8 = arith.cmpf oge, %6, %7 : vector<128x256xf32>
    %cst_7 = arith.constant 2.000000e-01 : f32
    %9 = vector.broadcast %cst_7 : f32 to vector<128x256xf32>
    %10 = arith.mulf %9, %6 : vector<128x256xf32>
    %11 = arith.select %8, %6, %10 : vector<128x256xi1>, vector<128x256xf32>
    %c0_8 = arith.constant 0 : index
    %c0_9 = arith.constant 0 : index
    %12 = vector.load %arg5[%c0_8, %c0_9] : memref<32x128xf32, #tpu.memory_space<vmem>>, vector<32x128xf32>
    %cst_10 = arith.constant dense<0.000000e+00> : vector<32x256xf32>
    %13 = tpu.matmul %12, %11, %cst_10 {dimension_numbers = #tpu.dot_dimension_numbers<[1], [0], [0], [1], [0, 0, 1, 1], [], []>} : vector<32x128xf32>, vector<128x256xf32>, vector<32x256xf32> -> vector<32x256xf32>
    %c0_11 = arith.constant 0 : index
    %c0_12 = arith.constant 0 : index
    %14 = vector.load %arg6[%c0_11, %c0_12] : memref<32x1xf32, #tpu.memory_space<vmem>>, vector<32x1xf32>
    %15 = vector.broadcast %14 : vector<32x1xf32> to vector<32x256xf32>
    %16 = arith.addf %13, %15 : vector<32x256xf32>
    %c0_13 = arith.constant 0 : index
    %c0_14 = arith.constant 0 : index
    %c0_15 = arith.constant 0 : index
    %17 = vector.load %arg7[%c0_13, %c0_14, %c0_15] : memref<1x32x256xf32, #tpu.memory_space<vmem>>, vector<1x32x256xf32>
    %18 = vector.shape_cast %17 : vector<1x32x256xf32> to vector<32x256xf32>
    %19 = vector.shape_cast %16 : vector<32x256xf32> to vector<1x32x256xf32>
    tpu.vector_store %arg7[%c0_13, %c0_14, %c0_15], %19 {strides = array<i32>} : memref<1x32x256xf32, #tpu.memory_space<vmem>>, vector<1x32x256xf32>,
    return
  }
  func.func @transform_0(%arg0: i32, %arg1: i32) -> (i32, i32, i32) {
    %c0_i32 = arith.constant 0 : i32
    %c0_i32_0 = arith.constant 0 : i32
    return %arg0, %c0_i32, %arg1 : i32, i32, i32
  }
  func.func @transform_1(%arg0: i32, %arg1: i32) -> (i32, i32) {
    %c0_i32 = arith.constant 0 : i32
    %c0_i32_0 = arith.constant 0 : i32
    %c0_i32_1 = arith.constant 0 : i32
    return %c0_i32, %c0_i32_0 : i32, i32
  }
  func.func @transform_2(%arg0: i32, %arg1: i32) -> (i32, i32) {
    %c0_i32 = arith.constant 0 : i32
    %c0_i32_0 = arith.constant 0 : i32
    %c0_i32_1 = arith.constant 0 : i32
    return %c0_i32, %c0_i32_0 : i32, i32
  }
  func.func @transform_3(%arg0: i32, %arg1: i32) -> (i32, i32) {
    %c0_i32 = arith.constant 0 : i32
    %c0_i32_0 = arith.constant 0 : i32
    %c0_i32_1 = arith.constant 0 : i32
    return %c0_i32, %c0_i32_0 : i32, i32
  }
  func.func @transform_4(%arg0: i32, %arg1: i32) -> (i32, i32) {
    %c0_i32 = arith.constant 0 : i32
    %c0_i32_0 = arith.constant 0 : i32
    %c0_i32_1 = arith.constant 0 : i32
    return %c0_i32, %c0_i32_0 : i32, i32
  }
  func.func @transform_5(%arg0: i32, %arg1: i32) -> (i32, i32, i32) {
    %c0_i32 = arith.constant 0 : i32
    %c0_i32_0 = arith.constant 0 : i32
    return %arg0, %c0_i32, %arg1 : i32, i32, i32
  }
}

</mosaic_0001>

<llo_original>
// kernel: tpu_custom_call.1
$region0: #{tpu_custom_call.1}
  #allocation0 [shape = 'u32[]', space=smem, size = 0x4, offset = 0x4, fixed_abs, tag = 'smem constant byte address 0x4 - core index']
  #allocation1 [shape = 'u32[144,128]{1,0:T(1,128)}', space=vmem, size = 0x12000, scoped, tag = 'internal scratch']
  %s0 = inlined_call_operand.vmem [shape: f32[2,32,256], index: 0, kind: input, shape index: {}]
  %s1 = inlined_call_operand.vmem [shape: f32[128,32], index: 1, kind: input, shape index: {}]
  %s2 = inlined_call_operand.vmem [shape: f32[128,1], index: 2, kind: input, shape index: {}]
  %s3 = inlined_call_operand.vmem [shape: f32[32,128], index: 3, kind: input, shape index: {}]
  %s4 = inlined_call_operand.vmem [shape: f32[32,1], index: 4, kind: input, shape index: {}]
  %s5 = inlined_call_operand.hbm [shape: f32[2,32,256], index: 5, kind: output, shape index: {}]
  %s6 = sld [smem:[#allocation0]]
  $region53: #{tpu_custom_call.1} parent=0
    _
  %s8 = ssub.s32 1, %s6
  %s9 = scalar_select 0, %s8, %s6
  $region1: #{tpu_custom_call.1} parent=0
    #allocation2 [shape = 'u8[65536]{0}', space=vmem, size = 0x10000, scoped, tag = 'output window, operand 0']
    #allocation3 [shape = 's32[2]{0}', space=sflag, size = 0x8, scoped, tag = 'scoped memory for tpu_custom_call.1']
    %10 = vsyncpa [#allocation3], 0
    %s11 = scalar_lea.sflag [#allocation3], 1
    %12 = vsyncpa %s11, 0
    loop: start=0, step=1, limit=4
    $region2: #{tpu_custom_call.1} parent=1 // loop_pre_header
      _
    $region3: #{tpu_custom_call.1} parent=1 // loop_header
      %s14 = sphi 0, %s18
      %p15 = scmp.ge.s32.totalorder %s14, 4
      %s21 = sphi 0, %s33
      %s22 = sphi 0, %s29
      %s23 = sphi 0, %s21
      %s24 = sphi 0, %s22
      %s25 = sphi 0, %s23
      %s26 = sphi 0, %s24
      %s38 = sphi 0, %s40
      %s41 = sphi 0, %s38
      %s42 = sphi 0, %s41
      %s58 = sphi 0, %s42
      %s62 = sphi 0, %s62
      %s64 = sphi 0, %s62
      %s65 = sphi 0, %s64
      %s79 = sphi 0, %s65
      %s83 = sphi 0, %s83
      %s85 = sphi 0, %s83
      %s86 = sphi 0, %s85
      %s100 = sphi 0, %s86
      %s104 = sphi 0, %s104
      %s106 = sphi 0, %s104
      %s107 = sphi 0, %s106
      %s121 = sphi 0, %s107
      %s125 = sphi 0, %s125
      %s127 = sphi 0, %s125
      %s128 = sphi 0, %s127
      %s142 = sphi 0, %s128
      %s150 = sphi 0, %s152
      %s153 = sphi 0, %s150
      %s154 = sphi 0, %s153
      %s170 = sphi 0, %s154
    $region4: #{tpu_custom_call.1} parent=1 // loop_header_branch
      %17 = sbr.rel (%p15) target = $region8
    $region5: #{tpu_custom_call.1} parent=1 // loop_body
      %s19 = ssub.s32 %s14, 1
      %s20 = ssub.s32 %s14, 2
      %s27 = sadd.s32 1, %s22
      %p28 = scmp.ge.s32.totalorder %s27, 1
      %s29 = scalar_select %p28, 0, %s27
      %s30 = sadd.s32 1, %s21
      %s31 = scalar_select %p28, %s30, %s21
      %p32 = scmp.ge.s32.totalorder %s31, 2
      %s33 = scalar_select %p32, 0, %s31
      %s34 = ssub.s32 %s21, %s33
      %s35 = ssub.s32 %s22, %s29
      %s36 = sor.u32 %s34, %s35
      %p37 = scmp.eq.s32.totalorder %s36, 0
      %s39 = sadd.s32 %s38, 1
      %s40 = scalar_select %p37, %s38, %s39
      %p43 = pneg %p37
      %p44 = scmp.eq.s32.totalorder %s14, 1
      %p45 = por %p43, %p44
      %p46 = scmp.ne.s32.totalorder %s38, %s41
      %p47 = scmp.eq.s32.totalorder %s14, 0
      %p48 = por %p46, %p47
      %p49 = scmp.ne.s32.totalorder %s38, %s41
      %p50 = scmp.eq.s32.totalorder %s19, 1
      %p51 = por %p49, %p50
      %p52 = scmp.ne.s32.totalorder %s41, %s42
      %p53 = scmp.eq.s32.totalorder %s19, 0
      %p54 = por %p52, %p53
      %p55 = scmp.ne.s32.totalorder %s41, %s42
      %p56 = scmp.eq.s32.totalorder %s20, 1
      %p57 = por %p55, %p56
      %p59 = scmp.ne.s32.totalorder %s42, %s58
      %p60 = scmp.eq.s32.totalorder %s20, 0
      %p61 = por %p59, %p60
      %s63 = sadd.s32 %s62, 1
      %p66 = scmp.eq.s32.totalorder %s14, 1
      %p67 = scmp.ne.s32.totalorder %s62, %s64
      %p68 = scmp.eq.s32.totalorder %s14, 0
      %p69 = por %p67, %p68
      %p70 = scmp.ne.s32.totalorder %s62, %s64
      %p71 = scmp.eq.s32.totalorder %s19, 1
      %p72 = por %p70, %p71
      %p73 = scmp.ne.s32.totalorder %s64, %s65
      %p74 = scmp.eq.s32.totalorder %s19, 0
      %p75 = por %p73, %p74
      %p76 = scmp.ne.s32.totalorder %s64, %s65
      %p77 = scmp.eq.s32.totalorder %s20, 1
      %p78 = por %p76, %p77
      %p80 = scmp.ne.s32.totalorder %s65, %s79
      %p81 = scmp.eq.s32.totalorder %s20, 0
      %p82 = por %p80, %p81
      %s84 = sadd.s32 %s83, 1
      %p87 = scmp.eq.s32.totalorder %s14, 1
      %p88 = scmp.ne.s32.totalorder %s83, %s85
      %p89 = scmp.eq.s32.totalorder %s14, 0
      %p90 = por %p88, %p89
      %p91 = scmp.ne.s32.totalorder %s83, %s85
      %p92 = scmp.eq.s32.totalorder %s19, 1
      %p93 = por %p91, %p92
      %p94 = scmp.ne.s32.totalorder %s85, %s86
      %p95 = scmp.eq.s32.totalorder %s19, 0
      %p96 = por %p94, %p95
      %p97 = scmp.ne.s32.totalorder %s85, %s86
      %p98 = scmp.eq.s32.totalorder %s20, 1
      %p99 = por %p97, %p98
      %p101 = scmp.ne.s32.totalorder %s86, %s100
      %p102 = scmp.eq.s32.totalorder %s20, 0
      %p103 = por %p101, %p102
      %s105 = sadd.s32 %s104, 1
      %p108 = scmp.eq.s32.totalorder %s14, 1
      %p109 = scmp.ne.s32.totalorder %s104, %s106
      %p110 = scmp.eq.s32.totalorder %s14, 0
      %p111 = por %p109, %p110
      %p112 = scmp.ne.s32.totalorder %s104, %s106
      %p113 = scmp.eq.s32.totalorder %s19, 1
      %p114 = por %p112, %p113
      %p115 = scmp.ne.s32.totalorder %s106, %s107
      %p116 = scmp.eq.s32.totalorder %s19, 0
      %p117 = por %p115, %p116
      %p118 = scmp.ne.s32.totalorder %s106, %s107
      %p119 = scmp.eq.s32.totalorder %s20, 1
      %p120 = por %p118, %p119
      %p122 = scmp.ne.s32.totalorder %s107, %s121
      %p123 = scmp.eq.s32.totalorder %s20, 0
      %p124 = por %p122, %p123
      %s126 = sadd.s32 %s125, 1
      %p129 = scmp.eq.s32.totalorder %s14, 1
      %p130 = scmp.ne.s32.totalorder %s125, %s127
      %p131 = scmp.eq.s32.totalorder %s14, 0
      %p132 = por %p130, %p131
      %p133 = scmp.ne.s32.totalorder %s125, %s127
      %p134 = scmp.eq.s32.totalorder %s19, 1
      %p135 = por %p133, %p134
      %p136 = scmp.ne.s32.totalorder %s127, %s128
      %p137 = scmp.eq.s32.totalorder %s19, 0
      %p138 = por %p136, %p137
      %p139 = scmp.ne.s32.totalorder %s127, %s128
      %p140 = scmp.eq.s32.totalorder %s20, 1
      %p141 = por %p139, %p140
      %p143 = scmp.ne.s32.totalorder %s128, %s142
      %p144 = scmp.eq.s32.totalorder %s20, 0
      %p145 = por %p143, %p144
      %s146 = ssub.s32 %s21, %s33
      %s147 = ssub.s32 %s22, %s29
      %s148 = sor.u32 %s146, %s147
      %p149 = scmp.eq.s32.totalorder %s148, 0
      %s151 = sadd.s32 %s150, 1
      %s152 = scalar_select %p149, %s150, %s151
      %p155 = pneg %p149
      %p156 = scmp.eq.s32.totalorder %s14, 1
      %p157 = por %p155, %p156
      %p158 = scmp.ne.s32.totalorder %s150, %s153
      %p159 = scmp.eq.s32.totalorder %s14, 0
      %p160 = por %p158, %p159
      %p161 = scmp.ne.s32.totalorder %s150, %s153
      %p162 = scmp.eq.s32.totalorder %s19, 1
      %p163 = por %p161, %p162
      %p164 = scmp.ne.s32.totalorder %s153, %s154
      %p165 = scmp.eq.s32.totalorder %s19, 0
      %p166 = por %p164, %p165
      %p167 = scmp.ne.s32.totalorder %s153, %s154
      %p168 = scmp.eq.s32.totalorder %s20, 1
      %p169 = por %p167, %p168
      %p171 = scmp.ne.s32.totalorder %s154, %s170
      %p172 = scmp.eq.s32.totalorder %s20, 0
      %p173 = por %p171, %p172
      %p174 = scmp.le.s32.totalorder 1, %s14
      %p175 = scmp.lt.s32.totalorder %s14, 3
      %p176 = pnand %p174, %p175
      %p177 = pneg %p176
      // Predicated region
      $region9: #{tpu_custom_call.1} parent=5 // pred_check
        _
      $region10: #{tpu_custom_call.1} parent=5 // pred_check_branch
        %179 = sbr.rel (%p176) target = $region12
      $region11: #{tpu_custom_call.1} parent=5 // pred_region
        %s180 = ssub.s32 %s14, 1
        // Predicated region
        $region13: #{tpu_custom_call.1} parent=11 // pred_check
          %p181 = pneg %p75
        $region14: #{tpu_custom_call.1} parent=11 // pred_check_branch
          %183 = sbr.rel (%p181) target = $region16
        $region15: #{tpu_custom_call.1} parent=11 // pred_region
          _
        $region16: #{tpu_custom_call.1} parent=11 // pred_fallthru
          _
        // Predicated region
        $region17: #{tpu_custom_call.1} parent=11 // pred_check
          %p184 = pneg %p96
        $region18: #{tpu_custom_call.1} parent=11 // pred_check_branch
          %186 = sbr.rel (%p184) target = $region20
        $region19: #{tpu_custom_call.1} parent=11 // pred_region
          _
        $region20: #{tpu_custom_call.1} parent=11 // pred_fallthru
          _
        // Predicated region
        $region21: #{tpu_custom_call.1} parent=11 // pred_check
          %p187 = pneg %p117
        $region22: #{tpu_custom_call.1} parent=11 // pred_check_branch
          %189 = sbr.rel (%p187) target = $region24
        $region23: #{tpu_custom_call.1} parent=11 // pred_region
          _
        $region24: #{tpu_custom_call.1} parent=11 // pred_fallthru
          _
        // Predicated region
        $region25: #{tpu_custom_call.1} parent=11 // pred_check
          %p190 = pneg %p138
        $region26: #{tpu_custom_call.1} parent=11 // pred_check_branch
          %192 = sbr.rel (%p190) target = $region28
        $region27: #{tpu_custom_call.1} parent=11 // pred_region
          _
        $region28: #{tpu_custom_call.1} parent=11 // pred_fallthru
          _
      $region12: #{tpu_custom_call.1} parent=5 // pred_fallthru
        _
      %p193 = scmp.lt.s32.totalorder %s14, 2
      // Predicated region
      $region29: #{tpu_custom_call.1} parent=5 // pred_check
        %p194 = pneg %p193
      $region30: #{tpu_custom_call.1} parent=5 // pred_check_branch
        %196 = sbr.rel (%p194) target = $region32
      $region31: #{tpu_custom_call.1} parent=5 // pred_region
        // Predicated region
        $region33: #{tpu_custom_call.1} parent=31 // pred_check
          %p197 = pneg %p48
        $region34: #{tpu_custom_call.1} parent=31 // pred_check_branch
          %199 = sbr.rel (%p197) target = $region36
        $region35: #{tpu_custom_call.1} parent=31 // pred_region
          %s200 = smul.u32 2, %s22
          %p201 = scmp.lt.s32.totalorder %s21, 1
          %s202 = scalar_select %p201, %s21, 1
          %p203 = scmp.lt.s32.totalorder %s200, 1
          %s204 = scalar_select %p203, %s200, 1
          %s205 = smul.addr %s202, 8
          %s206 = sadd.s32 %s204, %s205
          %s207 = smul.addr %s206, 8
          %s208 = scalar_lea.vmem %s0, %s207
          %s209 = smul.u32 2, %s22
        $region36: #{tpu_custom_call.1} parent=31 // pred_fallthru
          _
      $region32: #{tpu_custom_call.1} parent=5 // pred_fallthru
        _
      %p210 = scmp.le.s32.totalorder 1, %s14
      %p211 = scmp.lt.s32.totalorder %s14, 3
      %p212 = pnand %p210, %p211
      %p213 = pneg %p212
      // Predicated region
      $region37: #{tpu_custom_call.1} parent=5 // pred_check
        _
      $region38: #{tpu_custom_call.1} parent=5 // pred_check_branch
        %215 = sbr.rel (%p212) target = $region40
      $region39: #{tpu_custom_call.1} parent=5 // pred_region
        %s216 = ssub.s32 %s14, 1
        %s217 = smul.u32 2, %s24
        %p218 = scmp.lt.s32.totalorder %s23, 1
        %s219 = scalar_select %p218, %s23, 1
        %p220 = scmp.lt.s32.totalorder %s217, 1
        %s221 = scalar_select %p220, %s217, 1
        %s222 = smul.addr %s219, 8
        %s223 = sadd.s32 %s221, %s222
        %s224 = smul.addr %s223, 8
        %s225 = scalar_lea.vmem %s0, %s224
        %p226 = pneg %p54
        %p227 = pneg %p51
        %p228 = pneg %p75
        %p229 = pneg %p72
        %p230 = pneg %p96
        %p231 = pneg %p93
        %p232 = pneg %p117
        %p233 = pneg %p114
        %p234 = pneg %p138
        %p235 = pneg %p135
        %p236 = pneg %p166
        %p237 = pneg %p163
        %s238 = sand.u32 %s153, 1
        %s239 = scalar_lea.sflag [#allocation3], %s238
        %s240 = sand.u32 %s153, 1
        %s241 = smul.addr %s240, 64
        %s242 = scalar_lea.vmem [#allocation2], %s241
        %s243 = smul.u32 2, %s24
        %p244 = scmp.lt.s32.totalorder %s23, 1
        %s245 = scalar_select %p244, %s23, 1
        %p246 = scmp.lt.s32.totalorder %s243, 1
        %s247 = scalar_select %p246, %s243, 1
        %s248 = smul.addr %s245, 8
        %s249 = sadd.s32 %s247, %s248
        %s250 = smul.addr %s249, 8
        %s251 = scalar_lea.vmem %s0, %s250
        %s252 = smul.u32 2, %s24
        %s253 = smul.u32 2, %s24
        %v254 = vld [vmem:[%s251] sm:$0xff]
        %v255 = vld [vmem:[%s251 + $0x8] sm:$0xff]
        %v256 = vld [vmem:[%s251 + $0x10] sm:$0xff]
        %v257 = vld [vmem:[%s251 + $0x18] sm:$0xff]
        %v258 = vld [vmem:[%s251 + $0x20] sm:$0xff]
        %v259 = vld [vmem:[%s251 + $0x28] sm:$0xff]
        %v260 = vld [vmem:[%s251 + $0x30] sm:$0xff]
        %v261 = vld [vmem:[%s251 + $0x38] sm:$0xff]
        %v262 = vld [vmem:[%s1] sm:$0xff]
        %v263 = vld [vmem:[%s1 + $0x8] sm:$0xff]
        %v264 = vld [vmem:[%s1 + $0x10] sm:$0xff]
        %v265 = vld [vmem:[%s1 + $0x18] sm:$0xff]
        %v266 = vld [vmem:[%s1 + $0x20] sm:$0xff]
        %v267 = vld [vmem:[%s1 + $0x28] sm:$0xff]
        %v268 = vld [vmem:[%s1 + $0x30] sm:$0xff]
        %v269 = vld [vmem:[%s1 + $0x38] sm:$0xff]
        %v270 = vld [vmem:[%s1 + $0x40] sm:$0xff]
        %v271 = vld [vmem:[%s1 + $0x48] sm:$0xff]
        %v272 = vld [vmem:[%s1 + $0x50] sm:$0xff]
        %v273 = vld [vmem:[%s1 + $0x58] sm:$0xff]
        %v274 = vld [vmem:[%s1 + $0x60] sm:$0xff]
        %v275 = vld [vmem:[%s1 + $0x68] sm:$0xff]
        %v276 = vld [vmem:[%s1 + $0x70] sm:$0xff]
        %v277 = vld [vmem:[%s1 + $0x78] sm:$0xff]
        %v278 = vld [vmem:[%s2] sm:$0xff]
        %v279 = vld [vmem:[%s2 + $0x8] sm:$0xff]
        %v280 = vld [vmem:[%s2 + $0x10] sm:$0xff]
        %v281 = vld [vmem:[%s2 + $0x18] sm:$0xff]
        %v282 = vld [vmem:[%s2 + $0x20] sm:$0xff]
        %v283 = vld [vmem:[%s2 + $0x28] sm:$0xff]
        %v284 = vld [vmem:[%s2 + $0x30] sm:$0xff]
        %v285 = vld [vmem:[%s2 + $0x38] sm:$0xff]
        %v286 = vld [vmem:[%s2 + $0x40] sm:$0xff]
        %v287 = vld [vmem:[%s2 + $0x48] sm:$0xff]
        %v288 = vld [vmem:[%s2 + $0x50] sm:$0xff]
        %v289 = vld [vmem:[%s2 + $0x58] sm:$0xff]
        %v290 = vld [vmem:[%s2 + $0x60] sm:$0xff]
        %v291 = vld [vmem:[%s2 + $0x68] sm:$0xff]
        %v292 = vld [vmem:[%s2 + $0x70] sm:$0xff]
        %v293 = vld [vmem:[%s2 + $0x78] sm:$0xff]
        %295 = vset.pattern.permute.xlu0 0
        %296 = vperm.xlu0 %295, %v278
        %v297 = vpop.permute.xlu0 %296
        %300 = vset.pattern.permute.xlu0 0
        %301 = vperm.xlu0 %300, %v279
        %v302 = vpop.permute.xlu0 %301
        %305 = vset.pattern.permute.xlu0 0
        %306 = vperm.xlu0 %305, %v280
        %v307 = vpop.permute.xlu0 %306
        %310 = vset.pattern.permute.xlu0 0
        %311 = vperm.xlu0 %310, %v281
        %v312 = vpop.permute.xlu0 %311
        %315 = vset.pattern.permute.xlu0 0
        %316 = vperm.xlu0 %315, %v282
        %v317 = vpop.permute.xlu0 %316
        %320 = vset.pattern.permute.xlu0 0
        %321 = vperm.xlu0 %320, %v283
        %v322 = vpop.permute.xlu0 %321
        %325 = vset.pattern.permute.xlu0 0
        %326 = vperm.xlu0 %325, %v284
        %v327 = vpop.permute.xlu0 %326
        %330 = vset.pattern.permute.xlu0 0
        %331 = vperm.xlu0 %330, %v285
        %v332 = vpop.permute.xlu0 %331
        %335 = vset.pattern.permute.xlu0 0
        %336 = vperm.xlu0 %335, %v286
        %v337 = vpop.permute.xlu0 %336
        %340 = vset.pattern.permute.xlu0 0
        %341 = vperm.xlu0 %340, %v287
        %v342 = vpop.permute.xlu0 %341
        %345 = vset.pattern.permute.xlu0 0
        %346 = vperm.xlu0 %345, %v288
        %v347 = vpop.permute.xlu0 %346
        %350 = vset.pattern.permute.xlu0 0
        %351 = vperm.xlu0 %350, %v289
        %v352 = vpop.permute.xlu0 %351
        %355 = vset.pattern.permute.xlu0 0
        %356 = vperm.xlu0 %355, %v290
        %v357 = vpop.permute.xlu0 %356
        %360 = vset.pattern.permute.xlu0 0
        %361 = vperm.xlu0 %360, %v291
        %v362 = vpop.permute.xlu0 %361
        %365 = vset.pattern.permute.xlu0 0
        %366 = vperm.xlu0 %365, %v292
        %v367 = vpop.permute.xlu0 %366
        %370 = vset.pattern.permute.xlu0 0
        %371 = vperm.xlu0 %370, %v293
        %v372 = vpop.permute.xlu0 %371
        %vm374 = vcmask 261120
        %v376 = vsel %vm374, %v262, 0
        %v379 = vsel %vm374, %v263, 0
        %v382 = vsel %vm374, %v264, 0
        %v385 = vsel %vm374, %v265, 0
        %v388 = vsel %vm374, %v266, 0
        %v391 = vsel %vm374, %v267, 0
        %v394 = vsel %vm374, %v268, 0
        %v397 = vsel %vm374, %v269, 0
        %v400 = vsel %vm374, %v270, 0
        %v403 = vsel %vm374, %v271, 0
        %v406 = vsel %vm374, %v272, 0
        %v409 = vsel %vm374, %v273, 0
        %v412 = vsel %vm374, %v274, 0
        %v415 = vsel %vm374, %v275, 0
        %v418 = vsel %vm374, %v276, 0
        %v421 = vsel %vm374, %v277, 0
        %423 = vmatprep.subr.mxu0 0.0
        %424 = vmatpush1.msra.mxu0 0.0
        %425 = vmatprep.subr.mxu0 0.0
        %426 = vmatpush1.msra.mxu0 0.0
        %427 = vmatprep.subr.mxu0 0.0
        %428 = vmatpush1.msra.mxu0 0.0
        %429 = vmatprep.subr.mxu0 0.0
        %430 = vmatpush1.msra.mxu0 0.0
        %431 = vmatprep.subr.mxu0 0.0
        %432 = vmatpush1.msra.mxu0 0.0
        %433 = vmatprep.subr.mxu0 0.0
        %434 = vmatpush1.msra.mxu0 0.0
        %435 = vmatprep.subr.mxu0 0.0
        %436 = vmatpush1.msra.mxu0 0.0
        %437 = vmatprep.subr.mxu0 0.0
        %438 = vmatpush1.msra.mxu0 0.0
        %439 = vmatprep.subr.mxu0 0.0
        %440 = vmatpush1.msra.mxu0 0.0
        %441 = vmatprep.subr.mxu0 0.0
        %442 = vmatpush1.msra.mxu0 0.0
        %443 = vmatprep.subr.mxu0 0.0
        %444 = vmatpush1.msra.mxu0 0.0
        %445 = vmatprep.subr.mxu0 0.0
        %446 = vmatpush1.msra.mxu0 0.0
        %447 = vmatprep.subr.mxu0 %v261
        %448 = vmatpush1.msra.mxu0 %v260
        %449 = vmatprep.subr.mxu0 %v259
        %450 = vmatpush1.msra.mxu0 %v258
        %451 = vmatprep.subr.mxu0 %v257
        %452 = vmatpush1.msra.mxu0 %v256
        %453 = vmatprep.subr.mxu0 %v255
        %454 = vmatpush1.msra.mxu0 %v254
        %455 = vmatprep.subr.mxu0 0.0
        %456 = vmatpush2.msra.mxu0 0.0
        %457 = vmatprep.subr.mxu0 0.0
        %458 = vmatpush2.msra.mxu0 0.0
        %459 = vmatprep.subr.mxu0 0.0
        %460 = vmatpush2.msra.mxu0 0.0
        %461 = vmatprep.subr.mxu0 0.0
        %462 = vmatpush2.msra.mxu0 0.0
        %463 = vmatprep.subr.mxu0 0.0
        %464 = vmatpush2.msra.mxu0 0.0
        %465 = vmatprep.subr.mxu0 0.0
        %466 = vmatpush2.msra.mxu0 0.0
        %467 = vmatprep.subr.mxu0 0.0
        %468 = vmatpush2.msra.mxu0 0.0
        %469 = vmatprep.subr.mxu0 0.0
        %470 = vmatpush2.msra.mxu0 0.0
        %471 = vmatprep.subr.mxu0 0.0
        %472 = vmatpush2.msra.mxu0 0.0
        %473 = vmatprep.subr.mxu0 0.0
        %474 = vmatpush2.msra.mxu0 0.0
        %475 = vmatprep.subr.mxu0 0.0
        %476 = vmatpush2.msra.mxu0 0.0
        %477 = vmatprep.subr.mxu0 0.0
        %478 = vmatpush2.msra.mxu0 0.0
        %479 = vmatprep.subr.mxu0 0.0
        %480 = vmatpush2.msra.mxu0 0.0
        %481 = vmatprep.subr.mxu0 0.0
        %482 = vmatpush2.msra.mxu0 0.0
        %483 = vmatprep.subr.mxu0 0.0
        %484 = vmatpush2.msra.mxu0 0.0
        %485 = vmatprep.subr.mxu0 0.0
        %486 = vmatpush2.msra.mxu0 0.0
        %487 = vmatprep.mubr.f32.mxu0 0.0
        %488 = vmatmul.mubr.f32.gmra.mxu0 %v376
        %v489 = vpop.f32.mrf.mxu0
        %v490 = vadd.f32 %v297, %v489
        %v491 = vpop.f32.mrf.mxu0
        %v492 = vadd.f32 %v297, %v491
        %493 = vmatprep.mubr.f32.mxu0 0.0
        %494 = vmatmul.mubr.f32.gmra.mxu0 %v379
        %v495 = vpop.f32.mrf.mxu0
        %v496 = vadd.f32 %v302, %v495
        %v497 = vpop.f32.mrf.mxu0
        %v498 = vadd.f32 %v302, %v497
        %499 = vmatprep.mubr.f32.mxu0 0.0
        %500 = vmatmul.mubr.f32.gmra.mxu0 %v382
        %v501 = vpop.f32.mrf.mxu0
        %v502 = vadd.f32 %v307, %v501
        %v503 = vpop.f32.mrf.mxu0
        %v504 = vadd.f32 %v307, %v503
        %505 = vmatprep.mubr.f32.mxu0 0.0
        %506 = vmatmul.mubr.f32.gmra.mxu0 %v385
        %v507 = vpop.f32.mrf.mxu0
        %v508 = vadd.f32 %v312, %v507
        %v509 = vpop.f32.mrf.mxu0
        %v510 = vadd.f32 %v312, %v509
        %511 = vmatprep.mubr.f32.mxu0 0.0
        %512 = vmatmul.mubr.f32.gmra.mxu0 %v388
        %v513 = vpop.f32.mrf.mxu0
        %v514 = vadd.f32 %v317, %v513
        %v515 = vpop.f32.mrf.mxu0
        %v516 = vadd.f32 %v317, %v515
        %517 = vmatprep.mubr.f32.mxu0 0.0
        %518 = vmatmul.mubr.f32.gmra.mxu0 %v391
        %v519 = vpop.f32.mrf.mxu0
        %v520 = vadd.f32 %v322, %v519
        %v521 = vpop.f32.mrf.mxu0
        %v522 = vadd.f32 %v322, %v521
        %523 = vmatprep.mubr.f32.mxu0 0.0
        %524 = vmatmul.mubr.f32.gmra.mxu0 %v394
        %v525 = vpop.f32.mrf.mxu0
        %v526 = vadd.f32 %v327, %v525
        %v527 = vpop.f32.mrf.mxu0
        %v528 = vadd.f32 %v327, %v527
        %529 = vmatprep.mubr.f32.mxu0 0.0
        %530 = vmatmul.mubr.f32.gmra.mxu0 %v397
        %v531 = vpop.f32.mrf.mxu0
        %v532 = vadd.f32 %v332, %v531
        %v533 = vpop.f32.mrf.mxu0
        %v534 = vadd.f32 %v332, %v533
        %535 = vmatprep.mubr.f32.mxu0 0.0
        %536 = vmatmul.mubr.f32.gmra.mxu0 %v400
        %v537 = vpop.f32.mrf.mxu0
        %v538 = vadd.f32 %v337, %v537
        %v539 = vpop.f32.mrf.mxu0
        %v540 = vadd.f32 %v337, %v539
        %541 = vmatprep.mubr.f32.mxu0 0.0
        %542 = vmatmul.mubr.f32.gmra.mxu0 %v403
        %v543 = vpop.f32.mrf.mxu0
        %v544 = vadd.f32 %v342, %v543
        %v545 = vpop.f32.mrf.mxu0
        %v546 = vadd.f32 %v342, %v545
        %547 = vmatprep.mubr.f32.mxu0 0.0
        %548 = vmatmul.mubr.f32.gmra.mxu0 %v406
        %v549 = vpop.f32.mrf.mxu0
        %v550 = vadd.f32 %v347, %v549
        %v551 = vpop.f32.mrf.mxu0
        %v552 = vadd.f32 %v347, %v551
        %553 = vmatprep.mubr.f32.mxu0 0.0
        %554 = vmatmul.mubr.f32.gmra.mxu0 %v409
        %v555 = vpop.f32.mrf.mxu0
        %v556 = vadd.f32 %v352, %v555
        %v557 = vpop.f32.mrf.mxu0
        %v558 = vadd.f32 %v352, %v557
        %559 = vmatprep.mubr.f32.mxu0 0.0
        %560 = vmatmul.mubr.f32.gmra.mxu0 %v412
        %v561 = vpop.f32.mrf.mxu0
        %v562 = vadd.f32 %v357, %v561
        %v563 = vpop.f32.mrf.mxu0
        %v564 = vadd.f32 %v357, %v563
        %565 = vmatprep.mubr.f32.mxu0 0.0
        %566 = vmatmul.mubr.f32.gmra.mxu0 %v415
        %v567 = vpop.f32.mrf.mxu0
        %v568 = vadd.f32 %v362, %v567
        %v569 = vpop.f32.mrf.mxu0
        %v570 = vadd.f32 %v362, %v569
        %571 = vmatprep.mubr.f32.mxu0 0.0
        %572 = vmatmul.mubr.f32.gmra.mxu0 %v418
        %v573 = vpop.f32.mrf.mxu0
        %v574 = vadd.f32 %v367, %v573
        %v575 = vpop.f32.mrf.mxu0
        %v576 = vadd.f32 %v367, %v575
        %577 = vmatprep.mubr.f32.mxu0 0.0
        %578 = vmatmul.mubr.f32.gmra.mxu0 %v421
        %v579 = vpop.f32.mrf.mxu0
        %v580 = vadd.f32 %v372, %v579
        %v581 = vpop.f32.mrf.mxu0
        %v582 = vadd.f32 %v372, %v581
        %583 = vdwg.mxu0
        %vm584 = vcmp.ge.f32.partialorder %v490, 0.0
        %vm585 = vcmp.ge.f32.partialorder %v492, 0.0
        %vm586 = vcmp.ge.f32.partialorder %v496, 0.0
        %vm587 = vcmp.ge.f32.partialorder %v498, 0.0
        %vm588 = vcmp.ge.f32.partialorder %v502, 0.0
        %vm589 = vcmp.ge.f32.partialorder %v504, 0.0
        %vm590 = vcmp.ge.f32.partialorder %v508, 0.0
        %vm591 = vcmp.ge.f32.partialorder %v510, 0.0
        %vm592 = vcmp.ge.f32.partialorder %v514, 0.0
        %vm593 = vcmp.ge.f32.partialorder %v516, 0.0
        %vm594 = vcmp.ge.f32.partialorder %v520, 0.0
        %vm595 = vcmp.ge.f32.partialorder %v522, 0.0
        %vm596 = vcmp.ge.f32.partialorder %v526, 0.0
        %vm597 = vcmp.ge.f32.partialorder %v528, 0.0
        %vm598 = vcmp.ge.f32.partialorder %v532, 0.0
        %vm599 = vcmp.ge.f32.partialorder %v534, 0.0
        %vm600 = vcmp.ge.f32.partialorder %v538, 0.0
        %vm601 = vcmp.ge.f32.partialorder %v540, 0.0
        %vm602 = vcmp.ge.f32.partialorder %v544, 0.0
        %vm603 = vcmp.ge.f32.partialorder %v546, 0.0
        %vm604 = vcmp.ge.f32.partialorder %v550, 0.0
        %vm605 = vcmp.ge.f32.partialorder %v552, 0.0
        %vm606 = vcmp.ge.f32.partialorder %v556, 0.0
        %vm607 = vcmp.ge.f32.partialorder %v558, 0.0
        %vm608 = vcmp.ge.f32.partialorder %v562, 0.0
        %vm609 = vcmp.ge.f32.partialorder %v564, 0.0
        %vm610 = vcmp.ge.f32.partialorder %v568, 0.0
        %vm611 = vcmp.ge.f32.partialorder %v570, 0.0
        %vm612 = vcmp.ge.f32.partialorder %v574, 0.0
        %vm613 = vcmp.ge.f32.partialorder %v576, 0.0
        %vm614 = vcmp.ge.f32.partialorder %v580, 0.0
        %vm615 = vcmp.ge.f32.partialorder %v582, 0.0
        %v616 = vmul.f32 %v490, 0.2
        %v617 = vmul.f32 %v492, 0.2
        %v618 = vmul.f32 %v496, 0.2
        %v619 = vmul.f32 %v498, 0.2
        %v620 = vmul.f32 %v502, 0.2
        %v621 = vmul.f32 %v504, 0.2
        %v622 = vmul.f32 %v508, 0.2
        %v623 = vmul.f32 %v510, 0.2
        %v624 = vmul.f32 %v514, 0.2
        %v625 = vmul.f32 %v516, 0.2
        %v626 = vmul.f32 %v520, 0.2
        %v627 = vmul.f32 %v522, 0.2
        %v628 = vmul.f32 %v526, 0.2
        %v629 = vmul.f32 %v528, 0.2
        %v630 = vmul.f32 %v532, 0.2
        %v631 = vmul.f32 %v534, 0.2
        %v632 = vmul.f32 %v538, 0.2
        %v633 = vmul.f32 %v540, 0.2
        %v634 = vmul.f32 %v544, 0.2
        %v635 = vmul.f32 %v546, 0.2
        %v636 = vmul.f32 %v550, 0.2
        %v637 = vmul.f32 %v552, 0.2
        %v638 = vmul.f32 %v556, 0.2
        %v639 = vmul.f32 %v558, 0.2
        %v640 = vmul.f32 %v562, 0.2
        %v641 = vmul.f32 %v564, 0.2
        %v642 = vmul.f32 %v568, 0.2
        %v643 = vmul.f32 %v570, 0.2
        %v644 = vmul.f32 %v574, 0.2
        %v645 = vmul.f32 %v576, 0.2
        %v646 = vmul.f32 %v580, 0.2
        %v647 = vmul.f32 %v582, 0.2
        %v648 = vsel %vm584, %v490, %v616
        %v649 = vsel %vm585, %v492, %v617
        %v650 = vsel %vm586, %v496, %v618
        %v651 = vsel %vm587, %v498, %v619
        %v652 = vsel %vm588, %v502, %v620
        %v653 = vsel %vm589, %v504, %v621
        %v654 = vsel %vm590, %v508, %v622
        %v655 = vsel %vm591, %v510, %v623
        %v656 = vsel %vm592, %v514, %v624
        %v657 = vsel %vm593, %v516, %v625
        %v658 = vsel %vm594, %v520, %v626
        %v659 = vsel %vm595, %v522, %v627
        %v660 = vsel %vm596, %v526, %v628
        %v661 = vsel %vm597, %v528, %v629
        %v662 = vsel %vm598, %v532, %v630
        %v663 = vsel %vm599, %v534, %v631
        %v664 = vsel %vm600, %v538, %v632
        %v665 = vsel %vm601, %v540, %v633
        %v666 = vsel %vm602, %v544, %v634
        %v667 = vsel %vm603, %v546, %v635
        %v668 = vsel %vm604, %v550, %v636
        %v669 = vsel %vm605, %v552, %v637
        %v670 = vsel %vm606, %v556, %v638
        %v671 = vsel %vm607, %v558, %v639
        %v672 = vsel %vm608, %v562, %v640
        %v673 = vsel %vm609, %v564, %v641
        %v674 = vsel %vm610, %v568, %v642
        %v675 = vsel %vm611, %v570, %v643
        %v676 = vsel %vm612, %v574, %v644
        %v677 = vsel %vm613, %v576, %v645
        %v678 = vsel %vm614, %v580, %v646
        %v679 = vsel %vm615, %v582, %v647
        %v680 = vld [vmem:[%s3] sm:$0xff]
        %v681 = vld [vmem:[%s3 + $0x8] sm:$0xff]
        %v682 = vld [vmem:[%s3 + $0x10] sm:$0xff]
        %v683 = vld [vmem:[%s3 + $0x18] sm:$0xff]
        %v684 = vld [vmem:[%s4] sm:$0xff]
        %v685 = vld [vmem:[%s4 + $0x8] sm:$0xff]
        %v686 = vld [vmem:[%s4 + $0x10] sm:$0xff]
        %v687 = vld [vmem:[%s4 + $0x18] sm:$0xff]
        %689 = vset.pattern.permute.xlu0 0
        %690 = vperm.xlu0 %689, %v684
        %v691 = vpop.permute.xlu0 %690
        %694 = vset.pattern.permute.xlu0 0
        %695 = vperm.xlu0 %694, %v685
        %v696 = vpop.permute.xlu0 %695
        %699 = vset.pattern.permute.xlu0 0
        %700 = vperm.xlu0 %699, %v686
        %v701 = vpop.permute.xlu0 %700
        %704 = vset.pattern.permute.xlu0 0
        %705 = vperm.xlu0 %704, %v687
        %v706 = vpop.permute.xlu0 %705
        %708 = vmatprep.subr.mxu0 %v679
        %709 = vmatpush1.msra.mxu0 %v678
        %710 = vmatprep.subr.mxu0 %v677
        %711 = vmatpush1.msra.mxu0 %v676
        %712 = vmatprep.subr.mxu0 %v675
        %713 = vmatpush1.msra.mxu0 %v674
        %714 = vmatprep.subr.mxu0 %v673
        %715 = vmatpush1.msra.mxu0 %v672
        %716 = vmatprep.subr.mxu0 %v671
        %717 = vmatpush1.msra.mxu0 %v670
        %718 = vmatprep.subr.mxu0 %v669
        %719 = vmatpush1.msra.mxu0 %v668
        %720 = vmatprep.subr.mxu0 %v667
        %721 = vmatpush1.msra.mxu0 %v666
        %722 = vmatprep.subr.mxu0 %v665
        %723 = vmatpush1.msra.mxu0 %v664
        %724 = vmatprep.subr.mxu0 %v663
        %725 = vmatpush1.msra.mxu0 %v662
        %726 = vmatprep.subr.mxu0 %v661
        %727 = vmatpush1.msra.mxu0 %v660
        %728 = vmatprep.subr.mxu0 %v659
        %729 = vmatpush1.msra.mxu0 %v658
        %730 = vmatprep.subr.mxu0 %v657
        %731 = vmatpush1.msra.mxu0 %v656
        %732 = vmatprep.subr.mxu0 %v655
        %733 = vmatpush1.msra.mxu0 %v654
        %734 = vmatprep.subr.mxu0 %v653
        %735 = vmatpush1.msra.mxu0 %v652
        %736 = vmatprep.subr.mxu0 %v651
        %737 = vmatpush1.msra.mxu0 %v650
        %738 = vmatprep.subr.mxu0 %v649
        %739 = vmatpush1.msra.mxu0 %v648
        %740 = vmatprep.subr.mxu0 0.0
        %741 = vmatpush2.msra.mxu0 0.0
        %742 = vmatprep.subr.mxu0 0.0
        %743 = vmatpush2.msra.mxu0 0.0
        %744 = vmatprep.subr.mxu0 0.0
        %745 = vmatpush2.msra.mxu0 0.0
        %746 = vmatprep.subr.mxu0 0.0
        %747 = vmatpush2.msra.mxu0 0.0
        %748 = vmatprep.subr.mxu0 0.0
        %749 = vmatpush2.msra.mxu0 0.0
        %750 = vmatprep.subr.mxu0 0.0
        %751 = vmatpush2.msra.mxu0 0.0
        %752 = vmatprep.subr.mxu0 0.0
        %753 = vmatpush2.msra.mxu0 0.0
        %754 = vmatprep.subr.mxu0 0.0
        %755 = vmatpush2.msra.mxu0 0.0
        %756 = vmatprep.subr.mxu0 0.0
        %757 = vmatpush2.msra.mxu0 0.0
        %758 = vmatprep.subr.mxu0 0.0
        %759 = vmatpush2.msra.mxu0 0.0
        %760 = vmatprep.subr.mxu0 0.0
        %761 = vmatpush2.msra.mxu0 0.0
        %762 = vmatprep.subr.mxu0 0.0
        %763 = vmatpush2.msra.mxu0 0.0
        %764 = vmatprep.subr.mxu0 0.0
        %765 = vmatpush2.msra.mxu0 0.0
        %766 = vmatprep.subr.mxu0 0.0
        %767 = vmatpush2.msra.mxu0 0.0
        %768 = vmatprep.subr.mxu0 0.0
        %769 = vmatpush2.msra.mxu0 0.0
        %770 = vmatprep.subr.mxu0 0.0
        %771 = vmatpush2.msra.mxu0 0.0
        %772 = vmatprep.mubr.f32.mxu0 0.0
        %773 = vmatmul.mubr.f32.gmra.mxu0 %v680
        %v774 = vpop.f32.mrf.mxu0
        %v775 = vadd.f32 %v691, %v774
        %v776 = vpop.f32.mrf.mxu0
        %v777 = vadd.f32 %v691, %v776
        %778 = vmatprep.mubr.f32.mxu0 0.0
        %779 = vmatmul.mubr.f32.gmra.mxu0 %v681
        %v780 = vpop.f32.mrf.mxu0
        %v781 = vadd.f32 %v696, %v780
        %v782 = vpop.f32.mrf.mxu0
        %v783 = vadd.f32 %v696, %v782
        %784 = vmatprep.mubr.f32.mxu0 0.0
        %785 = vmatmul.mubr.f32.gmra.mxu0 %v682
        %v786 = vpop.f32.mrf.mxu0
        %v787 = vadd.f32 %v701, %v786
        %v788 = vpop.f32.mrf.mxu0
        %v789 = vadd.f32 %v701, %v788
        %790 = vmatprep.mubr.f32.mxu0 0.0
        %791 = vmatmul.mubr.f32.gmra.mxu0 %v683
        %v792 = vpop.f32.mrf.mxu0
        %v793 = vadd.f32 %v706, %v792
        %v794 = vpop.f32.mrf.mxu0
        %v795 = vadd.f32 %v706, %v794
        %796 = vdwg.mxu0
        %797 = vst [vmem:[%s242] sm:$0xff] %v775
        %798 = vst [vmem:[%s242 + $0x8] sm:$0xff] %v777
        %799 = vst [vmem:[%s242 + $0x10] sm:$0xff] %v781
        %800 = vst [vmem:[%s242 + $0x18] sm:$0xff] %v783
        %801 = vst [vmem:[%s242 + $0x20] sm:$0xff] %v787
        %802 = vst [vmem:[%s242 + $0x28] sm:$0xff] %v789
        %803 = vst [vmem:[%s242 + $0x30] sm:$0xff] %v793
        %804 = vst [vmem:[%s242 + $0x38] sm:$0xff] %v795
        %s805 = sand.u32 %s153, 1
        %s806 = scalar_lea.sflag [#allocation3], %s805
        %s807 = sand.u32 %s153, 1
        %s808 = smul.addr %s807, 64
        %s809 = scalar_lea.vmem [#allocation2], %s808
        // Predicated region
        $region41: #{tpu_custom_call.1} parent=39 // pred_check
          %p810 = pneg %p163
        $region42: #{tpu_custom_call.1} parent=39 // pred_check_branch
          %812 = sbr.rel (%p810) target = $region44
        $region43: #{tpu_custom_call.1} parent=39 // pred_region
          %s813 = smul.u32 2, %s24
          %s815 = ssub.s32 1024, 1024
          %816 = vsyncadd %s806, %s815
          %s817 = smul.addr %s23, 8
          %s818 = sadd.s32 %s813, %s817
          %s819 = smul.addr %s818, 128
          %s820 = scalar_lea.hbm %s5, %s819
          %s821 = sshll.u32 %s809, 4
          %s822 = int_to_ptr.vmem [resolvable:$true] %s821
          %827 = dma.vmem_to_hbm [thread:$0]  %s822, 1024, %s820, %s806, 256, 256, 16
        $region44: #{tpu_custom_call.1} parent=39 // pred_fallthru
          _
      $region40: #{tpu_custom_call.1} parent=5 // pred_fallthru
        _
      %p828 = scmp.le.s32.totalorder 2, %s14
      // Predicated region
      $region45: #{tpu_custom_call.1} parent=5 // pred_check
        %p829 = pneg %p828
      $region46: #{tpu_custom_call.1} parent=5 // pred_check_branch
        %831 = sbr.rel (%p829) target = $region48
      $region47: #{tpu_custom_call.1} parent=5 // pred_region
        %s832 = ssub.s32 %s14, 2
        // Predicated region
        $region49: #{tpu_custom_call.1} parent=47 // pred_check
          %p833 = pneg %p169
        $region50: #{tpu_custom_call.1} parent=47 // pred_check_branch
          %835 = sbr.rel (%p833) target = $region52
        $region51: #{tpu_custom_call.1} parent=47 // pred_region
          %s836 = sand.u32 %s154, 1
          %s837 = scalar_lea.sflag [#allocation3], %s836
          %s838 = sand.u32 %s154, 1
          %s839 = smul.addr %s838, 64
          %s840 = scalar_lea.vmem [#allocation2], %s839
          %841 = dma.done %s837, 1024
        $region52: #{tpu_custom_call.1} parent=47 // pred_fallthru
          _
      $region48: #{tpu_custom_call.1} parent=5 // pred_fallthru
        _
    $region6: #{tpu_custom_call.1} parent=1 // loop_footer
      %s18 = sadd.s32 1, %s14
    $region7: #{tpu_custom_call.1} parent=1 // loop_footer_branch
      %13 = sbr.rel target = $region3
    $region8: #{tpu_custom_call.1} parent=1 // loop_exit
      _
    %842 = vsyncpa [#allocation3], 1
    %s843 = scalar_lea.sflag [#allocation3], 1
    %844 = vsyncpa %s843, 1

</llo_original>
